<compile_context>
chip_gen: v5e
topology: v5e:2x2
jax: 0.10.0
libtpu: 0.0.40
codegen_flags: <defaults>
</compile_context>

<pallas_src>
import functools

import jax
import jax.numpy as jnp
from jax.experimental import pallas as pl
from jax.experimental.pallas import tpu as pltpu

_LANE = 128


def _round_up(x, m):
    return ((x + m - 1) // m) * m


# --------------------------- BCE partial-sum kernel ---------------------------
def _bce_partial_kernel(x_ref, t_ref, out_ref):
    x = x_ref[...].astype(jnp.float32)
    t = t_ref[...].astype(jnp.float32)
    # numerically-stable BCEWithLogits (matches torch):
    #   max(x,0) - x*t + log1p(exp(-|x|))
    # exp/log1p go to the EUP slot, which has slack in this HBM-bound scan.
    bce = jnp.maximum(x, 0.0) - x * t + jnp.log1p(jnp.exp(-jnp.abs(x)))
    # per-row partial sums; final (tiny) reduction happens in the wrapper so the
    # grid axis carries no state and can run "parallel".
    out_ref[...] = jnp.sum(bce, axis=1, keepdims=True)


def _bce_mean(scores, targets, *, block_rows=512):
    """Mean BCE-with-logits over all elements (lane-dense, parallel grid)."""
    total = scores.size
    itemsize = jnp.dtype(scores.dtype).itemsize

    # lane-dense layout: flatten (N, C) -> 1-D -> (rows, 128)
    rows = pl.cdiv(total, _LANE)

    # VMEM-budget-aware row block: 2 inputs x 2 pipeline buffers per tile, kept
    # well under the smallest scoped budget (v7x: 32 MiB scoped of 64 MiB phys).
    tile_budget = 8 << 20
    tm_cap = max(8, (tile_budget // (2 * 2 * _LANE * itemsize)) // 8 * 8)
    tm = min(int(block_rows), tm_cap, _round_up(rows, 8))
    tm = max(8, _round_up(tm, 8))

    rows_pad = _round_up(rows, tm)
    pad = rows_pad * _LANE - total
    # Pad scores with a large logit and targets with 1.0: each padded element
    # contributes max(x,0) - x*1 + log1p(exp(-x)) ~= 0, so no in-kernel tail
    # mask (and no correction term) is needed on the hot path.
    scores_f = jnp.pad(scores.reshape(-1), (0, pad), constant_values=100.0)
    targets_f = jnp.pad(targets.reshape(-1), (0, pad), constant_values=1.0)
    scores_f = scores_f.reshape(rows_pad, _LANE)
    targets_f = targets_f.reshape(rows_pad, _LANE)

    num_blocks = rows_pad // tm
    needed = 2 * 2 * tm * _LANE * itemsize + 2 * tm * 4
    vmem_limit = int(min(max(4 * needed, 8 << 20), 32 << 20))

    row_sums = pl.pallas_call(
        _bce_partial_kernel,
        grid=(num_blocks,),
        out_shape=jax.ShapeDtypeStruct((rows_pad, 1), jnp.float32),
        in_specs=[
            pl.BlockSpec((tm, _LANE), lambda i: (i, 0)),
            pl.BlockSpec((tm, _LANE), lambda i: (i, 0)),
        ],
        out_specs=pl.BlockSpec((tm, 1), lambda i: (i, 0)),
        compiler_params=pltpu.CompilerParams(
            # per-block partial sums: no cross-step carry -> grid can be sharded
            # across both TensorCores on v7x (near-neutral on v5e/v6e).
            dimension_semantics=("parallel",),
            vmem_limit_bytes=vmem_limit,
        ),
    )(scores_f, targets_f)

    # tiny final reduce + mean in plain XLA (reciprocal-multiply, constant-folded)
    return jnp.sum(row_sums) * jnp.float32(1.0 / total)


# ------------------------------ Triplet kernel ------------------------------
def _triplet_kernel(feats_ref, out_ref, *, margin, half):
    f = feats_ref[...]                      # (BS, D) = [n ; a], native dtype
    bs = f.shape[0]

    # single fused Gram matmul on the MXU, contracting the feature dim of both
    # operands directly (no explicit transpose), f32 accumulation.  Anchors are
    # selected by masking Gram rows -> no duplicated anchor input / HBM read.
    gram = jax.lax.dot_general(
        f, f, (((1,), (1,)), ((), ())),
        preferred_element_type=jnp.float32)                 # (BS, BS)
    f32 = f.astype(jnp.float32)
    sq = jnp.sum(f32 * f32, axis=1, keepdims=True)          # (BS, 1)
    # squared pairwise distances via the Gram identity (clamped at 0; small
    # cancellation vs explicit-difference cdist is hidden by margin=100).
    d2 = sq + sq.T - 2.0 * gram                             # (BS, BS)

    row = jax.lax.broadcasted_iota(jnp.int32, (bs, bs), 0)
    anchor_row = row < half
    # reduce over the anchor axis on *squared* distances; sqrt/clamp are
    # monotone so they commute with max/min -> O(BS) sqrt instead of O(half*BS).
    d2_max = jnp.max(jnp.where(anchor_row, d2, -jnp.inf), axis=0, keepdims=True)  # (1, BS)
    d2_min = jnp.min(jnp.where(anchor_row, d2, jnp.inf), axis=0, keepdims=True)   # (1, BS)

    n_d_max = jnp.sqrt(jnp.maximum(d2_max, 0.0))                       # col-max of cdist(n, .)
    hinge = jnp.maximum(0.0, margin - jnp.sqrt(jnp.maximum(d2_min, 0.0)))

    col = jax.lax.broadcasted_iota(jnp.int32, (1, bs), 1)
    sum_nn = jnp.sum(jnp.where(col < half, n_d_max, 0.0))   # columns in the "n" half
    sum_na = jnp.sum(jnp.where(col >= half, hinge, 0.0))    # columns in the "a" half
    out_ref[0] = (sum_nn + sum_na) * (1.0 / half)


def _triplet(feats, *, margin=100.0):
    bs, _ = feats.shape
    assert bs % 2 == 0, "feats batch size must be even"
    half = bs // 2
    # TODO(synk): for large BS/D, tile the Gram over the column axis with running
    # column-max/min carries instead of materializing the full (BS, BS) f32 d2.
    kernel = functools.partial(_triplet_kernel, margin=float(margin), half=half)
    out = pl.pallas_call(
        kernel,
        out_shape=jax.ShapeDtypeStruct((1,), jnp.float32),
        in_specs=[pl.BlockSpec(memory_space=pltpu.MemorySpace.VMEM)],
        out_specs=pl.BlockSpec(memory_space=pltpu.MemorySpace.SMEM),
    )(feats)
    return out[0]


# --------------------------------- wrapper ----------------------------------
def loss_forward(scores, feats, targets, alpha=0.01, margin=100.0, block_rows=512):
    """Returns (loss_ce, alpha * loss_triplet) as float32 scalars."""
    assert scores.shape == targets.shape, "scores/targets shape mismatch"
    loss_ce = _bce_mean(scores, targets, block_rows=block_rows)
    loss_triplet = _triplet(feats, margin=margin)
    return loss_ce, alpha * loss_triplet


# -------------------------------- reference ---------------------------------
def _reference(scores, feats, targets, alpha=0.01, margin=100.0):
    x = scores.astype(jnp.float32)
    t = targets.astype(jnp.float32)
    loss_ce = jnp.mean(jnp.maximum(x, 0.0) - x * t + jnp.log1p(jnp.exp(-jnp.abs(x))))

    f = feats.astype(jnp.float32)
    half = f.shape[0] // 2
    n, a = f[:half], f[half:]
    n_d = jnp.sqrt(jnp.maximum(
        jnp.sum((n[:, None, :] - n[None, :, :]) ** 2, axis=-1), 0.0))
    a_d = jnp.sqrt(jnp.maximum(
        jnp.sum((n[:, None, :] - a[None, :, :]) ** 2, axis=-1), 0.0))
    n_d_max = jnp.max(n_d, axis=0)
    a_d_min = jnp.maximum(0.0, margin - jnp.min(a_d, axis=0))
    loss_triplet = jnp.mean(n_d_max) + jnp.mean(a_d_min)
    return loss_ce, alpha * loss_triplet


if __name__ == "__main__":
    key = jax.random.PRNGKey(0)
    k1, k2, k3, k4, k5 = jax.random.split(key, 5)

    # small shapes consistent with the module
    N, C = 20, 4      # scores / targets (N*C not a multiple of 128 -> pad path)
    BS, D = 8, 32     # feats (BS must be even)

    scores = jax.random.normal(k1, (N, C), dtype=jnp.float32)
    targets = (jax.random.uniform(k2, (N, C)) > 0.5).astype(jnp.float32)
    feats = jax.random.normal(k3, (BS, D), dtype=jnp.float32)

    ref_ce, ref_trip = _reference(scores, feats, targets)

    # default block size (single-block BCE grid)
    loss_ce, loss_trip = loss_forward(scores, feats, targets)
    jax.block_until_ready((loss_ce, loss_trip))
    assert jnp.allclose(loss_ce, ref_ce, rtol=1e-3, atol=1e-3), (loss_ce, ref_ce)
    assert jnp.allclose(loss_trip, ref_trip, rtol=1e-3, atol=1e-3), (loss_trip, ref_trip)

    # larger scores exercise the multi-block parallel grid + lane/tail padding
    N2, C2 = 300, 17
    scores2 = jax.random.normal(k4, (N2, C2), dtype=jnp.float32)
    targets2 = (jax.random.uniform(k5, (N2, C2)) > 0.5).astype(jnp.float32)
    ref_ce2, _ = _reference(scores2, feats, targets2)
    loss_ce2, loss_trip2 = loss_forward(scores2, feats, targets2, block_rows=8)
    jax.block_until_ready((loss_ce2, loss_trip2))
    assert jnp.allclose(loss_ce2, ref_ce2, rtol=1e-3, atol=1e-3), (loss_ce2, ref_ce2)
    assert jnp.allclose(loss_trip2, ref_trip, rtol=1e-3, atol=1e-3), (loss_trip2, ref_trip)

    print("KERNEL_OK")
</pallas_src>

<mosaic_0001>
module attributes {stable_mosaic.version = 11 : i64} {
  func.func @_bce_partial_kernel(%arg0: i32, %arg1: memref<8x128xf32, #tpu.memory_space<vmem>>, %arg2: memref<8x128xf32, #tpu.memory_space<vmem>>, %arg3: memref<8x1xf32, #tpu.memory_space<vmem>>) attributes {dimension_semantics = [#tpu.dimension_semantics<parallel>], iteration_bounds = array<i64: 1>, scalar_prefetch = 0 : i64, scratch_operands = 0 : i64, tpu.core_type = #tpu.core_type<tc>, window_params = [{transform_indices = @transform_0, window_bounds = array<i64: 8, 128>}, {transform_indices = @transform_1, window_bounds = array<i64: 8, 128>}, {transform_indices = @transform_2, window_bounds = array<i64: 8, 1>}]} {
    %c0 = arith.constant 0 : index
    %c0_0 = arith.constant 0 : index
    %0 = vector.load %arg1[%c0, %c0_0] : memref<8x128xf32, #tpu.memory_space<vmem>>, vector<8x128xf32>
    %c0_1 = arith.constant 0 : index
    %c0_2 = arith.constant 0 : index
    %1 = vector.load %arg2[%c0_1, %c0_2] : memref<8x128xf32, #tpu.memory_space<vmem>>, vector<8x128xf32>
    %cst = arith.constant 0.000000e+00 : f32
    %2 = vector.broadcast %cst : f32 to vector<8x128xf32>
    %3 = arith.maximumf %0, %2 : vector<8x128xf32>
    %4 = arith.mulf %0, %1 : vector<8x128xf32>
    %5 = arith.subf %3, %4 : vector<8x128xf32>
    %6 = math.absf %0 : vector<8x128xf32>
    %cst_3 = arith.constant 0.000000e+00 : f32
    %7 = vector.broadcast %cst_3 : f32 to vector<8x128xf32>
    %8 = arith.subf %7, %6 : vector<8x128xf32>
    %9 = math.exp %8 : vector<8x128xf32>
    %10 = math.log1p %9 : vector<8x128xf32>
    %11 = arith.addf %5, %10 : vector<8x128xf32>
    %cst_4 = arith.constant dense<0.000000e+00> : vector<8xf32>
    %12 = vector.multi_reduction <add>, %11, %cst_4 [1] : vector<8x128xf32> to vector<8xf32>
    %13 = vector.shape_cast %12 : vector<8xf32> to vector<8x1xf32>
    %c0_5 = arith.constant 0 : index
    %c0_6 = arith.constant 0 : index
    %14 = vector.load %arg3[%c0_5, %c0_6] : memref<8x1xf32, #tpu.memory_space<vmem>>, vector<8x1xf32>
    tpu.vector_store %arg3[%c0_5, %c0_6], %13 {strides = array<i32>} : memref<8x1xf32, #tpu.memory_space<vmem>>, vector<8x1xf32>,
    return
  }
  func.func @transform_0(%arg0: i32) -> (i32, i32) {
    %c0_i32 = arith.constant 0 : i32
    %c0_i32_0 = arith.constant 0 : i32
    return %arg0, %c0_i32 : i32, i32
  }
  func.func @transform_1(%arg0: i32) -> (i32, i32) {
    %c0_i32 = arith.constant 0 : i32
    %c0_i32_0 = arith.constant 0 : i32
    return %arg0, %c0_i32 : i32, i32
  }
  func.func @transform_2(%arg0: i32) -> (i32, i32) {
    %c0_i32 = arith.constant 0 : i32
    %c0_i32_0 = arith.constant 0 : i32
    return %arg0, %c0_i32 : i32, i32
  }
}

</mosaic_0001>

<llo_original>
// kernel: tpu_custom_call.1
$region0: #{tpu_custom_call.1}
  #allocation0 [shape = 'u32[]', space=smem, size = 0x4, offset = 0x4, fixed_abs, tag = 'smem constant byte address 0x4 - core index']
  #allocation1 [shape = 'u32[72,128]{1,0:T(1,128)}', space=vmem, size = 0x9000, scoped, tag = 'internal scratch']
  %s0 = inlined_call_operand.hbm [shape: f32[8,128], index: 0, kind: input, shape index: {}]
  %s1 = inlined_call_operand.hbm [shape: f32[8,128], index: 1, kind: input, shape index: {}]
  %s2 = inlined_call_operand.vmem [shape: f32[8,1], index: 2, kind: output, shape index: {}]
  %s3 = sld [smem:[#allocation0]]
  $region26: #{tpu_custom_call.1} parent=0
    _
  %s5 = ssub.s32 1, %s3
  %s6 = scalar_select 0, %s5, %s3
  $region1: #{tpu_custom_call.1} parent=0
    #allocation2 [shape = 'u8[4096]{0}', space=vmem, size = 0x1000, scoped, tag = 'input window, operand 0, single buffered']
    #allocation3 [shape = 's32[1]{0}', space=sflag, size = 0x4, scoped, tag = 'scoped memory for tpu_custom_call.1']
    #allocation4 [shape = 'u8[4096]{0}', space=vmem, size = 0x1000, scoped, tag = 'input window, operand 1, single buffered']
    #allocation5 [shape = 's32[1]{0}', space=sflag, size = 0x4, scoped, tag = 'scoped memory for tpu_custom_call.1']
    %7 = vsyncpa [#allocation3], 0
    %8 = vsyncpa [#allocation5], 0
    // Predicated region
    $region2: #{tpu_custom_call.1} parent=1 // pred_check
      _
    $region3: #{tpu_custom_call.1} parent=1 // pred_check_branch
      %10 = sbr.rel (0) target = $region5
    $region4: #{tpu_custom_call.1} parent=1 // pred_region
      %12 = vsyncadd [#allocation3], 0
      %s14 = sshll.u32 %s0, 4
      %s15 = int_to_ptr.hbm [resolvable:$true] %s14
      %s16 = sshll.u32 [#allocation2], 4
      %s17 = int_to_ptr.vmem [resolvable:$true] %s16
      %19 = dma.hbm_to_vmem [thread:$0]  %s15, 128, %s17, [#allocation3]
    $region5: #{tpu_custom_call.1} parent=1 // pred_fallthru
      _
    // Predicated region
    $region6: #{tpu_custom_call.1} parent=1 // pred_check
      _
    $region7: #{tpu_custom_call.1} parent=1 // pred_check_branch
      %21 = sbr.rel (0) target = $region9
    $region8: #{tpu_custom_call.1} parent=1 // pred_region
      %23 = vsyncadd [#allocation5], 0
      %s25 = sshll.u32 %s1, 4
      %s26 = int_to_ptr.hbm [resolvable:$true] %s25
      %s27 = sshll.u32 [#allocation4], 4
      %s28 = int_to_ptr.vmem [resolvable:$true] %s27
      %30 = dma.hbm_to_vmem [thread:$0]  %s26, 128, %s28, [#allocation5]
    $region9: #{tpu_custom_call.1} parent=1 // pred_fallthru
      _
    // Predicated region
    $region10: #{tpu_custom_call.1} parent=1 // pred_check
      _
    $region11: #{tpu_custom_call.1} parent=1 // pred_check_branch
      %32 = sbr.rel (0) target = $region13
    $region12: #{tpu_custom_call.1} parent=1 // pred_region
      %34 = dma.done [#allocation3], 128
    $region13: #{tpu_custom_call.1} parent=1 // pred_fallthru
      _
    // Predicated region
    $region14: #{tpu_custom_call.1} parent=1 // pred_check
      _
    $region15: #{tpu_custom_call.1} parent=1 // pred_check_branch
      %36 = sbr.rel (0) target = $region17
    $region16: #{tpu_custom_call.1} parent=1 // pred_region
      %38 = dma.done [#allocation5], 128
    $region17: #{tpu_custom_call.1} parent=1 // pred_fallthru
      _
    %v39 = vld [vmem:[#allocation2] sm:$0xff]
    %v40 = vld [vmem:[#allocation4] sm:$0xff]
    %v41 = vmax.f32 %v39, 0.0
    %v42 = vmul.f32 %v39, %v40
    %v43 = vsub.f32 %v41, %v42
    %v44 = vand.u32 2147483647, %v39
    %v45 = vsub.f32 0.0, %v44
    %v46 = vmul.f32 %v45, 1.442695
    %v47 = vpow.pop %v46
    %v48 = vadd.f32 %v47, 1.0
    %v49 = vlog2.pop %v48
    %v50 = vmul.f32 %v49, 0.6931472
    %v51 = vmul.f32 -0.5, %v47
    %v52 = vadd.f32 %v51, 1.0
    %v53 = vmul.f32 %v52, %v47
    %v54 = vand.u32 2147483647, %v47
    %vm55 = vcmp.lt.f32.partialorder %v54, 0.0004427343
    %v56 = vsel %vm55, %v53, %v50
    %v57 = vadd.f32 %v43, %v56
    %58 = vadd.xlane.f32.xlu0 %v57
    %v59 = vpop.xlane.xlu0 %58
    %vm60 = vcmask 7168
    %61 = vst.msk [vmem:[%s2] sm:$0xff] %vm60, %v59
    // Predicated region
    $region18: #{tpu_custom_call.1} parent=1 // pred_check
      _
    $region19: #{tpu_custom_call.1} parent=1 // pred_check_branch
      %63 = sbr.rel (0) target = $region21
    $region20: #{tpu_custom_call.1} parent=1 // pred_region
      _
    $region21: #{tpu_custom_call.1} parent=1 // pred_fallthru
      _
    // Predicated region
    $region22: #{tpu_custom_call.1} parent=1 // pred_check
      _
    $region23: #{tpu_custom_call.1} parent=1 // pred_check_branch
      %65 = sbr.rel (0) target = $region25
    $region24: #{tpu_custom_call.1} parent=1 // pred_region
      _
    $region25: #{tpu_custom_call.1} parent=1 // pred_fallthru
      _
    %66 = vsyncpa [#allocation3], 1
    %67 = vsyncpa [#allocation5], 1

</llo_original>
